<compile_context>
chip_gen: v7x
topology: tpu7x:2x2x1
jax: 0.10.0
libtpu: 0.0.40
codegen_flags: <defaults>
</compile_context>

<pallas_src>
import functools

import jax
import jax.numpy as jnp
from jax.experimental import pallas as pl
from jax.experimental.pallas import tpu as pltpu


def _round_up(x, m):
    return (x + m - 1) // m * m


def _pick_tile(total, max_tile, quantum):
    """Pick tile (multiple of `quantum`, <= max_tile) minimizing padding of `total`.

    Returns (tile, padded_total).  Prefers larger tiles on ties.
    """
    total_q = _round_up(total, quantum)
    best = None
    for t in range(quantum, min(max_tile, total_q) + 1, quantum):
        padded = _round_up(total_q, t)
        key = (padded, -t)
        if best is None or key < best[0]:
            best = (key, t, padded)
    return best[1], best[2]


def _vmem_bytes(tm, ep, th, cbytes, obytes, multi):
    """Estimated VMEM working set for one grid step (double-buffered I/O)."""
    b = (
        2 * tm * ep * cbytes            # x tile
        + 2 * ep * th * cbytes          # w1 tile
        + 2 * th * ep * cbytes          # w2 tile
        + 2 * 8 * th * 4 + 2 * 8 * ep * 4  # biases (sublane-padded)
        + 2 * tm * ep * obytes          # output tile
    )
    if multi:
        b += tm * ep * 4                # f32 accumulator scratch
    return b


def _ffn_kernel_single(x_ref, w1_ref, b1_ref, w2_ref, b2_ref, o_ref):
    # Whole hidden dim in one tile: fuse both matmuls, no scratch.
    h = jnp.dot(x_ref[...], w1_ref[...], preferred_element_type=jnp.float32)
    h = jnp.maximum(h + b1_ref[...], 0.0)
    # dropout == identity (eval mode)
    o_ref[...] = (
        jnp.dot(h.astype(w2_ref.dtype), w2_ref[...],
                preferred_element_type=jnp.float32)
        + b2_ref[...]
    ).astype(o_ref.dtype)


def _ffn_kernel_reduce(x_ref, w1_ref, b1_ref, w2_ref, b2_ref, o_ref, acc_ref):
    # x_ref:  (TM, Ep)   bf16 token tile (resident across the hidden axis)
    # w1_ref: (Ep, TH)   bf16 linear1 weight H-tile
    # b1_ref: (1, TH)    f32
    # w2_ref: (TH, Ep)   bf16 linear2 weight H-tile
    # b2_ref: (1, Ep)    f32
    # o_ref:  (TM, Ep)   output tile (x.dtype)
    # acc_ref:(TM, Ep)   f32 VMEM accumulator (resident across the hidden axis)
    k = pl.program_id(1)

    @pl.when(k == 0)
    def _init():
        acc_ref[...] = jnp.zeros_like(acc_ref)

    # linear1 partial tile on the MXU (bf16 operands, f32 accumulation)
    h = jnp.dot(x_ref[...], w1_ref[...], preferred_element_type=jnp.float32)
    # bias + ReLU in f32 on the VPU
    h = jnp.maximum(h + b1_ref[...], 0.0)
    # dropout == identity (eval mode)

    # linear2 partial: cast to MXU dtype only for the dot, accumulate in f32
    acc_ref[...] += jnp.dot(
        h.astype(w2_ref.dtype), w2_ref[...], preferred_element_type=jnp.float32
    )

    @pl.when(k == pl.num_programs(1) - 1)
    def _finalize():
        o_ref[...] = (acc_ref[...] + b2_ref[...]).astype(o_ref.dtype)


@functools.partial(
    jax.jit, static_argnames=("block_tokens", "block_hidden", "compute_dtype")
)
def position_wise_feed_forward(
    x, w1, b1, w2, b2, *, block_tokens=256, block_hidden=512,
    compute_dtype=jnp.bfloat16,
):
    """x: (batch, seq, E); w1: (E, H); b1: (H,); w2: (H, E); b2: (E,)."""
    assert block_tokens % 8 == 0 and block_hidden % 128 == 0
    batch, seq, embed = x.shape
    hidden = w1.shape[1]
    tokens = batch * seq

    cbytes = jnp.dtype(compute_dtype).itemsize
    obytes = jnp.dtype(x.dtype).itemsize
    ep = _round_up(embed, 128)                 # lane-dense feature dim

    # Pick tiles that minimise padding, then auto-shrink until the working set
    # fits a conservative VMEM budget (safe across v5e / v6e / v7x).
    vmem_budget = 40 * 1024 * 1024
    bt, bh = block_tokens, block_hidden
    while True:
        tm, tp = _pick_tile(tokens, bt, 8)      # token tile / padded tokens
        th, hp = _pick_tile(hidden, bh, 128)    # hidden tile / padded hidden
        multi = hp > th
        vmem_est = _vmem_bytes(tm, ep, th, cbytes, obytes, multi)
        if vmem_est <= vmem_budget or (bh <= 128 and bt <= 8):
            break
        if bh > 128:
            bh //= 2
        else:
            bt = max(8, bt // 2)

    # Pad (zeros are exact no-ops through both matmuls) and cast MXU operands.
    x2d = x.reshape(tokens, embed).astype(compute_dtype)
    x2d = jnp.pad(x2d, ((0, tp - tokens), (0, ep - embed)))
    w1p = jnp.pad(w1.astype(compute_dtype), ((0, ep - embed), (0, hp - hidden)))
    w2p = jnp.pad(w2.astype(compute_dtype), ((0, hp - hidden), (0, ep - embed)))
    b1p = jnp.pad(b1.astype(jnp.float32), (0, hp - hidden)).reshape(1, hp)
    b2p = jnp.pad(b2.astype(jnp.float32), (0, ep - embed)).reshape(1, ep)

    n_token_tiles = tp // tm
    vmem_limit = min(128 * 1024 * 1024,
                     max(32 * 1024 * 1024, int(vmem_est * 1.5)))
    cost = pl.CostEstimate(
        flops=4 * tp * ep * hp,                 # two matmuls, 2 flops per MAC
        transcendentals=0,
        bytes_accessed=int(
            tp * ep * (cbytes + obytes)
            + n_token_tiles * (ep * hp + hp * ep) * cbytes
            + (hp + ep) * 4
        ),
    )

    if not multi:
        # Whole hidden dim in one tile: 1-D grid, weights resident across grid.
        grid_spec = pltpu.PrefetchScalarGridSpec(
            num_scalar_prefetch=0,
            grid=(n_token_tiles,),
            in_specs=[
                pl.BlockSpec((tm, ep), lambda i: (i, 0)),   # x tile
                pl.BlockSpec((ep, hp), lambda i: (0, 0)),   # w1 (whole)
                pl.BlockSpec((1, hp), lambda i: (0, 0)),    # b1
                pl.BlockSpec((hp, ep), lambda i: (0, 0)),   # w2 (whole)
                pl.BlockSpec((1, ep), lambda i: (0, 0)),    # b2
            ],
            out_specs=pl.BlockSpec((tm, ep), lambda i: (i, 0)),
        )
        kernel = _ffn_kernel_single
        dim_sem = ("parallel",)
    else:
        grid_spec = pltpu.PrefetchScalarGridSpec(
            num_scalar_prefetch=0,
            grid=(n_token_tiles, hp // th),     # (tokens: parallel, hidden: reduction)
            in_specs=[
                pl.BlockSpec((tm, ep), lambda i, k: (i, 0)),  # x tile (k-invariant)
                pl.BlockSpec((ep, th), lambda i, k: (0, k)),  # w1 H-tile
                pl.BlockSpec((1, th), lambda i, k: (0, k)),   # b1 H-tile
                pl.BlockSpec((th, ep), lambda i, k: (k, 0)),  # w2 H-tile
                pl.BlockSpec((1, ep), lambda i, k: (0, 0)),   # b2 (constant)
            ],
            out_specs=pl.BlockSpec((tm, ep), lambda i, k: (i, 0)),
            scratch_shapes=[pltpu.VMEM((tm, ep), jnp.float32)],
        )
        kernel = _ffn_kernel_reduce
        dim_sem = ("parallel", "arbitrary")

    out2d = pl.pallas_call(
        kernel,
        out_shape=jax.ShapeDtypeStruct((tp, ep), x.dtype),
        grid_spec=grid_spec,
        compiler_params=pltpu.CompilerParams(
            dimension_semantics=dim_sem,
            vmem_limit_bytes=vmem_limit,
        ),
        cost_estimate=cost,
    )(x2d, w1p, b1p, w2p, b2p)

    return out2d[:tokens, :embed].reshape(batch, seq, embed)


def init_params(key, embedding_dim, hidden):
    """Deterministic parameter init (uniform fan-in, like torch.nn.Linear)."""
    k1, k2, k3, k4 = jax.random.split(key, 4)
    bound1 = 1.0 / (embedding_dim ** 0.5)
    bound2 = 1.0 / (hidden ** 0.5)
    # stored as (in_features, out_features) == torch weight transposed
    w1 = jax.random.uniform(k1, (embedding_dim, hidden), jnp.float32, -bound1, bound1)
    b1 = jax.random.uniform(k2, (hidden,), jnp.float32, -bound1, bound1)
    w2 = jax.random.uniform(k3, (hidden, embedding_dim), jnp.float32, -bound2, bound2)
    b2 = jax.random.uniform(k4, (embedding_dim,), jnp.float32, -bound2, bound2)
    return w1, b1, w2, b2


if __name__ == "__main__":
    batch, seq, embedding_dim, hidden = 2, 8, 32, 64

    key = jax.random.PRNGKey(0)
    kx, kp = jax.random.split(key)
    x = jax.random.normal(kx, (batch, seq, embedding_dim), dtype=jnp.float32)
    w1, b1, w2, b2 = init_params(kp, embedding_dim, hidden)

    # Exercise the fused single-pass path (small hidden) ...
    out = position_wise_feed_forward(x, w1, b1, w2, b2)
    out = jax.block_until_ready(out)
    assert out.shape == (batch, seq, embedding_dim)
    assert out.dtype == x.dtype

    # ... and the hidden-reduction path (force small hidden tiles).
    out_r = position_wise_feed_forward(x, w1, b1, w2, b2, block_hidden=128)
    out_r = jax.block_until_ready(out_r)

    # Reference with matching bf16 MXU operands / f32 accumulation (tight check).
    xb = x.reshape(-1, embedding_dim).astype(jnp.bfloat16)
    hb = jnp.maximum(
        jnp.dot(xb, w1.astype(jnp.bfloat16), preferred_element_type=jnp.float32) + b1,
        0.0,
    )
    ref_bf16 = (
        jnp.dot(hb.astype(jnp.bfloat16), w2.astype(jnp.bfloat16),
                preferred_element_type=jnp.float32) + b2
    ).reshape(batch, seq, embedding_dim)
    assert jnp.allclose(out, ref_bf16, atol=2e-3, rtol=2e-3)
    assert jnp.allclose(out_r, ref_bf16, atol=2e-3, rtol=2e-3)

    # Full-precision reference (loose sanity check of the math).
    ref_f32 = jnp.maximum(x @ w1 + b1, 0.0) @ w2 + b2
    assert jnp.allclose(out, ref_f32, atol=5e-2, rtol=5e-2)
    assert jnp.allclose(out_r, ref_f32, atol=5e-2, rtol=5e-2)

    print("KERNEL_OK")
</pallas_src>

<mosaic_0001>
module attributes {stable_mosaic.version = 11 : i64} {
  func.func @_ffn_kernel_single(%arg0: i32, %arg1: memref<16x128xbf16, #tpu.memory_space<vmem>>, %arg2: memref<128x128xbf16, #tpu.memory_space<vmem>>, %arg3: memref<1x128xf32, #tpu.memory_space<vmem>>, %arg4: memref<128x128xbf16, #tpu.memory_space<vmem>>, %arg5: memref<1x128xf32, #tpu.memory_space<vmem>>, %arg6: memref<16x128xf32, #tpu.memory_space<vmem>>) attributes {dimension_semantics = [#tpu.dimension_semantics<parallel>], iteration_bounds = array<i64: 1>, scalar_prefetch = 0 : i64, scratch_operands = 0 : i64, tpu.core_type = #tpu.core_type<tc>, window_params = [{transform_indices = @transform_0, window_bounds = array<i64: 16, 128>}, {pipeline_mode = #tpu.pipeline_mode<synchronous>, transform_indices = @transform_1, window_bounds = array<i64: 128, 128>}, {pipeline_mode = #tpu.pipeline_mode<synchronous>, transform_indices = @transform_2, window_bounds = array<i64: 1, 128>}, {pipeline_mode = #tpu.pipeline_mode<synchronous>, transform_indices = @transform_3, window_bounds = array<i64: 128, 128>}, {pipeline_mode = #tpu.pipeline_mode<synchronous>, transform_indices = @transform_4, window_bounds = array<i64: 1, 128>}, {transform_indices = @transform_5, window_bounds = array<i64: 16, 128>}]} {
    %c0 = arith.constant 0 : index
    %c0_0 = arith.constant 0 : index
    %0 = vector.load %arg1[%c0, %c0_0] : memref<16x128xbf16, #tpu.memory_space<vmem>>, vector<16x128xbf16>
    %c0_1 = arith.constant 0 : index
    %c0_2 = arith.constant 0 : index
    %1 = vector.load %arg2[%c0_1, %c0_2] : memref<128x128xbf16, #tpu.memory_space<vmem>>, vector<128x128xbf16>
    %cst = arith.constant dense<0.000000e+00> : vector<16x128xf32>
    %2 = tpu.matmul %0, %1, %cst {dimension_numbers = #tpu.dot_dimension_numbers<[1], [0], [0], [1], [0, 0, 1, 1], [], []>} : vector<16x128xbf16>, vector<128x128xbf16>, vector<16x128xf32> -> vector<16x128xf32>
    %c0_3 = arith.constant 0 : index
    %c0_4 = arith.constant 0 : index
    %3 = vector.load %arg3[%c0_3, %c0_4] : memref<1x128xf32, #tpu.memory_space<vmem>>, vector<1x128xf32>
    %4 = vector.broadcast %3 : vector<1x128xf32> to vector<16x128xf32>
    %5 = arith.addf %2, %4 : vector<16x128xf32>
    %cst_5 = arith.constant 0.000000e+00 : f32
    %6 = vector.broadcast %cst_5 : f32 to vector<16x128xf32>
    %7 = arith.maximumf %5, %6 : vector<16x128xf32>
    %8 = arith.truncf %7 : vector<16x128xf32> to vector<16x128xbf16>
    %c0_6 = arith.constant 0 : index
    %c0_7 = arith.constant 0 : index
    %9 = vector.load %arg4[%c0_6, %c0_7] : memref<128x128xbf16, #tpu.memory_space<vmem>>, vector<128x128xbf16>
    %cst_8 = arith.constant dense<0.000000e+00> : vector<16x128xf32>
    %10 = tpu.matmul %8, %9, %cst_8 {dimension_numbers = #tpu.dot_dimension_numbers<[1], [0], [0], [1], [0, 0, 1, 1], [], []>} : vector<16x128xbf16>, vector<128x128xbf16>, vector<16x128xf32> -> vector<16x128xf32>
    %c0_9 = arith.constant 0 : index
    %c0_10 = arith.constant 0 : index
    %11 = vector.load %arg5[%c0_9, %c0_10] : memref<1x128xf32, #tpu.memory_space<vmem>>, vector<1x128xf32>
    %12 = vector.broadcast %11 : vector<1x128xf32> to vector<16x128xf32>
    %13 = arith.addf %10, %12 : vector<16x128xf32>
    %c0_11 = arith.constant 0 : index
    %c0_12 = arith.constant 0 : index
    %14 = vector.load %arg6[%c0_11, %c0_12] : memref<16x128xf32, #tpu.memory_space<vmem>>, vector<16x128xf32>
    tpu.vector_store %arg6[%c0_11, %c0_12], %13 {strides = array<i32>} : memref<16x128xf32, #tpu.memory_space<vmem>>, vector<16x128xf32>,
    return
  }
  func.func @transform_0(%arg0: i32) -> (i32, i32) {
    %c0_i32 = arith.constant 0 : i32
    %c0_i32_0 = arith.constant 0 : i32
    return %arg0, %c0_i32 : i32, i32
  }
  func.func @transform_1(%arg0: i32) -> (i32, i32) {
    %c0_i32 = arith.constant 0 : i32
    %c0_i32_0 = arith.constant 0 : i32
    %c0_i32_1 = arith.constant 0 : i32
    return %c0_i32, %c0_i32_0 : i32, i32
  }
  func.func @transform_2(%arg0: i32) -> (i32, i32) {
    %c0_i32 = arith.constant 0 : i32
    %c0_i32_0 = arith.constant 0 : i32
    %c0_i32_1 = arith.constant 0 : i32
    return %c0_i32, %c0_i32_0 : i32, i32
  }
  func.func @transform_3(%arg0: i32) -> (i32, i32) {
    %c0_i32 = arith.constant 0 : i32
    %c0_i32_0 = arith.constant 0 : i32
    %c0_i32_1 = arith.constant 0 : i32
    return %c0_i32, %c0_i32_0 : i32, i32
  }
  func.func @transform_4(%arg0: i32) -> (i32, i32) {
    %c0_i32 = arith.constant 0 : i32
    %c0_i32_0 = arith.constant 0 : i32
    %c0_i32_1 = arith.constant 0 : i32
    return %c0_i32, %c0_i32_0 : i32, i32
  }
  func.func @transform_5(%arg0: i32) -> (i32, i32) {
    %c0_i32 = arith.constant 0 : i32
    %c0_i32_0 = arith.constant 0 : i32
    return %arg0, %c0_i32 : i32, i32
  }
}

</mosaic_0001>

<llo_original>
// kernel: position_wise_feed_forward.1
$region0: #{position_wise_feed_forward.1}
  #allocation0 [shape = 'u32[]', space=smem, size = 0x4, offset = 0x4, fixed_abs, tag = 'smem constant byte address 0x4 - core index']
  #allocation1 [shape = 'u32[144,128]{1,0:T(1,128)}', space=vmem, size = 0x12000, scoped, tag = 'internal scratch']
  %s0 = inlined_call_operand.vmem [shape: bf16[16,128], index: 0, kind: input, shape index: {}]
  %s1 = inlined_call_operand.vmem [shape: bf16[128,128], index: 1, kind: input, shape index: {}]
  %s2 = inlined_call_operand.vmem [shape: f32[1,128], index: 2, kind: input, shape index: {}]
  %s3 = inlined_call_operand.vmem [shape: bf16[128,128], index: 3, kind: input, shape index: {}]
  %s4 = inlined_call_operand.vmem [shape: f32[1,128], index: 4, kind: input, shape index: {}]
  %s5 = inlined_call_operand.vmem [shape: f32[16,128], index: 5, kind: output, shape index: {}]
  %s6 = sld [smem:[#allocation0]]
  $region30: #{position_wise_feed_forward.1} parent=0
    _
  %s8 = ssub.s32 1, %s6
  %s9 = scalar_select 0, %s8, %s6
  // Predicated region
  $region2: #{position_wise_feed_forward.1} parent=0 // pred_check
    _
  $region3: #{position_wise_feed_forward.1} parent=0 // pred_check_branch
    %11 = sbr.rel (0) target = $region5
  $region4: #{position_wise_feed_forward.1} parent=0 // pred_region
    _
  $region5: #{position_wise_feed_forward.1} parent=0 // pred_fallthru
    _
  // Predicated region
  $region6: #{position_wise_feed_forward.1} parent=0 // pred_check
    _
  $region7: #{position_wise_feed_forward.1} parent=0 // pred_check_branch
    %13 = sbr.rel (0) target = $region9
  $region8: #{position_wise_feed_forward.1} parent=0 // pred_region
    _
  $region9: #{position_wise_feed_forward.1} parent=0 // pred_fallthru
    _
  // Predicated region
  $region10: #{position_wise_feed_forward.1} parent=0 // pred_check
    _
  $region11: #{position_wise_feed_forward.1} parent=0 // pred_check_branch
    %15 = sbr.rel (0) target = $region13
  $region12: #{position_wise_feed_forward.1} parent=0 // pred_region
    _
  $region13: #{position_wise_feed_forward.1} parent=0 // pred_fallthru
    _
  // Predicated region
  $region14: #{position_wise_feed_forward.1} parent=0 // pred_check
    _
  $region15: #{position_wise_feed_forward.1} parent=0 // pred_check_branch
    %17 = sbr.rel (0) target = $region17
  $region16: #{position_wise_feed_forward.1} parent=0 // pred_region
    _
  $region17: #{position_wise_feed_forward.1} parent=0 // pred_fallthru
    _
  // Predicated region
  $region18: #{position_wise_feed_forward.1} parent=0 // pred_check
    _
  $region19: #{position_wise_feed_forward.1} parent=0 // pred_check_branch
    %19 = sbr.rel (0) target = $region21
  $region20: #{position_wise_feed_forward.1} parent=0 // pred_region
    _
  $region21: #{position_wise_feed_forward.1} parent=0 // pred_fallthru
    _
  %v21 = vld [vmem:[%s0] sm:$0xf]
  %v22 = vld [vmem:[%s0 + $0x4] sm:$0xf]
  %v23 = vld [vmem:[%s1] sm:$0xf]
  %v24 = vld [vmem:[%s1 + $0x4] sm:$0xf]
  %v25 = vld [vmem:[%s1 + $0x8] sm:$0xf]
  %v26 = vld [vmem:[%s1 + $0xc] sm:$0xf]
  %v27 = vld [vmem:[%s1 + $0x10] sm:$0xf]
  %v28 = vld [vmem:[%s1 + $0x14] sm:$0xf]
  %v29 = vld [vmem:[%s1 + $0x18] sm:$0xf]
  %v30 = vld [vmem:[%s1 + $0x1c] sm:$0xf]
  %v31 = vld [vmem:[%s1 + $0x20] sm:$0xf]
  %v32 = vld [vmem:[%s1 + $0x24] sm:$0xf]
  %v33 = vld [vmem:[%s1 + $0x28] sm:$0xf]
  %v34 = vld [vmem:[%s1 + $0x2c] sm:$0xf]
  %v35 = vld [vmem:[%s1 + $0x30] sm:$0xf]
  %v36 = vld [vmem:[%s1 + $0x34] sm:$0xf]
  %v37 = vld [vmem:[%s1 + $0x38] sm:$0xf]
  %v38 = vld [vmem:[%s1 + $0x3c] sm:$0xf]
  %v39 = vld [vmem:[%s2] sm:$0x1]
  %v41 = vlaneseq
  %v42 = vshrl.u32 %v41, 7
  %v43 = vsub.s32 0, %v42
  %v44 = vrot.slane %v39, %v43
  %v48 = vunpack.c.l.b16 %v21
  %v49 = vunpack.c.l.b16 %v22
  %v50 = vpack.c.b16 %v49, %v48
  %v68 = vunpack.c.l.b16 %v23
  %v69 = vunpack.c.l.b16 %v24
  %v70 = vunpack.c.l.b16 %v25
  %v71 = vunpack.c.l.b16 %v26
  %v72 = vunpack.c.l.b16 %v27
  %v73 = vunpack.c.l.b16 %v28
  %v74 = vunpack.c.l.b16 %v29
  %v75 = vunpack.c.l.b16 %v30
  %v76 = vunpack.c.l.b16 %v31
  %v77 = vunpack.c.l.b16 %v32
  %v78 = vunpack.c.l.b16 %v33
  %v79 = vunpack.c.l.b16 %v34
  %v80 = vunpack.c.l.b16 %v35
  %v81 = vunpack.c.l.b16 %v36
  %v82 = vunpack.c.l.b16 %v37
  %v83 = vunpack.c.l.b16 %v38
  %v84 = vpack.c.b16 %v69, %v68
  %v85 = vpack.c.b16 %v71, %v70
  %v86 = vpack.c.b16 %v73, %v72
  %v87 = vpack.c.b16 %v75, %v74
  %v88 = vpack.c.b16 %v77, %v76
  %v89 = vpack.c.b16 %v79, %v78
  %v90 = vpack.c.b16 %v81, %v80
  %v91 = vpack.c.b16 %v83, %v82
  %100 = vmatprep.subr.bf16.mxu0 0
  %101 = vmatpush1.bf16.msra.mxu0 %v84
  %102 = vmatprep.subr.bf16.mxu0 0
  %103 = vmatpush1.bf16.msra.mxu0 %v85
  %104 = vmatprep.subr.bf16.mxu0 0
  %105 = vmatpush1.bf16.msra.mxu0 %v86
  %106 = vmatprep.subr.bf16.mxu0 0
  %107 = vmatpush1.bf16.msra.mxu0 %v87
  %108 = vmatprep.subr.bf16.mxu0 0
  %109 = vmatpush1.bf16.msra.mxu0 %v88
  %110 = vmatprep.subr.bf16.mxu0 0
  %111 = vmatpush1.bf16.msra.mxu0 %v89
  %112 = vmatprep.subr.bf16.mxu0 0
  %113 = vmatpush1.bf16.msra.mxu0 %v90
  %114 = vmatprep.subr.bf16.mxu0 0
  %115 = vmatpush1.bf16.msra.mxu0 %v91
  %116 = vmatprep.subr.bf16.mxu0 0
  %117 = vmatpush1.bf16.msra.mxu0 0
  %118 = vmatprep.subr.bf16.mxu0 0
  %119 = vmatpush1.bf16.msra.mxu0 0
  %120 = vmatprep.subr.bf16.mxu0 0
  %121 = vmatpush1.bf16.msra.mxu0 0
  %122 = vmatprep.subr.bf16.mxu0 0
  %123 = vmatpush1.bf16.msra.mxu0 0
  %124 = vmatprep.subr.bf16.mxu0 0
  %125 = vmatpush1.bf16.msra.mxu0 0
  %126 = vmatprep.subr.bf16.mxu0 0
  %127 = vmatpush1.bf16.msra.mxu0 0
  %128 = vmatprep.subr.bf16.mxu0 0
  %129 = vmatpush1.bf16.msra.mxu0 0
  %130 = vmatprep.subr.bf16.mxu0 0
  %131 = vmatpush1.bf16.msra.mxu0 0
  %132 = vmatprep.mubr.bf16.mxu0 0
  %133 = vmatmul.mubr.bf16.gmra.mrb[0].mxu0 %v50
  %v134 = vpop.f32.mrb[0].mxu0
  %v135 = vadd.f32 %v44, %v134
  %v136 = vpop.f32.mrb[0].mxu0
  %v137 = vpop.f32.mrb[0].mxu0
  %v138 = vadd.f32 %v44, %v137
  %v139 = vpop.f32.mrb[0].mxu0
  %140 = vdwg.mxu0
  %v141 = vmax.f32 %v135, 0.0
  %v142 = vmax.f32 %v138, 0.0
  %v143 = vpack.c.bf16 %v142, %v141
  %v144 = vld [vmem:[%s3] sm:$0xf]
  %v145 = vld [vmem:[%s3 + $0x4] sm:$0xf]
  %v146 = vld [vmem:[%s3 + $0x8] sm:$0xf]
  %v147 = vld [vmem:[%s3 + $0xc] sm:$0xf]
  %v148 = vld [vmem:[%s3 + $0x10] sm:$0xf]
  %v149 = vld [vmem:[%s3 + $0x14] sm:$0xf]
  %v150 = vld [vmem:[%s3 + $0x18] sm:$0xf]
  %v151 = vld [vmem:[%s3 + $0x1c] sm:$0xf]
  %v152 = vld [vmem:[%s3 + $0x20] sm:$0xf]
  %v153 = vld [vmem:[%s3 + $0x24] sm:$0xf]
  %v154 = vld [vmem:[%s3 + $0x28] sm:$0xf]
  %v155 = vld [vmem:[%s3 + $0x2c] sm:$0xf]
  %v156 = vld [vmem:[%s3 + $0x30] sm:$0xf]
  %v157 = vld [vmem:[%s3 + $0x34] sm:$0xf]
  %v158 = vld [vmem:[%s3 + $0x38] sm:$0xf]
  %v159 = vld [vmem:[%s3 + $0x3c] sm:$0xf]
  %v160 = vld [vmem:[%s4] sm:$0x1]
  %v162 = vlaneseq
  %v163 = vshrl.u32 %v162, 7
  %v164 = vsub.s32 0, %v163
  %v165 = vrot.slane %v160, %v164
  %v183 = vunpack.c.l.b16 %v144
  %v184 = vunpack.c.l.b16 %v145
  %v185 = vunpack.c.l.b16 %v146
  %v186 = vunpack.c.l.b16 %v147
  %v187 = vunpack.c.l.b16 %v148
  %v188 = vunpack.c.l.b16 %v149
  %v189 = vunpack.c.l.b16 %v150
  %v190 = vunpack.c.l.b16 %v151
  %v191 = vunpack.c.l.b16 %v152
  %v192 = vunpack.c.l.b16 %v153
  %v193 = vunpack.c.l.b16 %v154
  %v194 = vunpack.c.l.b16 %v155
  %v195 = vunpack.c.l.b16 %v156
  %v196 = vunpack.c.l.b16 %v157
  %v197 = vunpack.c.l.b16 %v158
  %v198 = vunpack.c.l.b16 %v159
  %v199 = vpack.c.b16 %v184, %v183
  %v200 = vpack.c.b16 %v186, %v185
  %v201 = vpack.c.b16 %v188, %v187
  %v202 = vpack.c.b16 %v190, %v189
  %v203 = vpack.c.b16 %v192, %v191
  %v204 = vpack.c.b16 %v194, %v193
  %v205 = vpack.c.b16 %v196, %v195
  %v206 = vpack.c.b16 %v198, %v197
  %215 = vmatprep.subr.bf16.mxu0 0
  %216 = vmatpush1.bf16.msra.mxu0 %v199
  %217 = vmatprep.subr.bf16.mxu0 0
  %218 = vmatpush1.bf16.msra.mxu0 %v200
  %219 = vmatprep.subr.bf16.mxu0 0
  %220 = vmatpush1.bf16.msra.mxu0 %v201
  %221 = vmatprep.subr.bf16.mxu0 0
  %222 = vmatpush1.bf16.msra.mxu0 %v202
  %223 = vmatprep.subr.bf16.mxu0 0
  %224 = vmatpush1.bf16.msra.mxu0 %v203
  %225 = vmatprep.subr.bf16.mxu0 0
  %226 = vmatpush1.bf16.msra.mxu0 %v204
  %227 = vmatprep.subr.bf16.mxu0 0
  %228 = vmatpush1.bf16.msra.mxu0 %v205
  %229 = vmatprep.subr.bf16.mxu0 0
  %230 = vmatpush1.bf16.msra.mxu0 %v206
  %231 = vmatprep.subr.bf16.mxu0 0
  %232 = vmatpush1.bf16.msra.mxu0 0
  %233 = vmatprep.subr.bf16.mxu0 0
  %234 = vmatpush1.bf16.msra.mxu0 0
  %235 = vmatprep.subr.bf16.mxu0 0
  %236 = vmatpush1.bf16.msra.mxu0 0
  %237 = vmatprep.subr.bf16.mxu0 0
  %238 = vmatpush1.bf16.msra.mxu0 0
  %239 = vmatprep.subr.bf16.mxu0 0
  %240 = vmatpush1.bf16.msra.mxu0 0
  %241 = vmatprep.subr.bf16.mxu0 0
  %242 = vmatpush1.bf16.msra.mxu0 0
  %243 = vmatprep.subr.bf16.mxu0 0
  %244 = vmatpush1.bf16.msra.mxu0 0
  %245 = vmatprep.subr.bf16.mxu0 0
  %246 = vmatpush1.bf16.msra.mxu0 0
  %247 = vmatprep.mubr.bf16.mxu0 0
  %248 = vmatmul.mubr.bf16.gmra.mrb[0].mxu0 %v143
  %v249 = vpop.f32.mrb[0].mxu0
  %v250 = vadd.f32 %v165, %v249
  %v251 = vpop.f32.mrb[0].mxu0
  %v252 = vpop.f32.mrb[0].mxu0
  %v253 = vadd.f32 %v165, %v252
  %v254 = vpop.f32.mrb[0].mxu0
  %255 = vdwg.mxu0
  %256 = vst [vmem:[%s5] sm:$0xff] %v250
  %257 = vst [vmem:[%s5 + $0x8] sm:$0xff] %v253
  // Predicated region
  $region22: #{position_wise_feed_forward.1} parent=0 // pred_check
    _
  $region23: #{position_wise_feed_forward.1} parent=0 // pred_check_branch
    %259 = sbr.rel (0) target = $region25
  $region24: #{position_wise_feed_forward.1} parent=0 // pred_region
    _
  $region25: #{position_wise_feed_forward.1} parent=0 // pred_fallthru
    _
  // Predicated region
  $region26: #{position_wise_feed_forward.1} parent=0 // pred_check
    _
  $region27: #{position_wise_feed_forward.1} parent=0 // pred_check_branch
    %261 = sbr.rel (0) target = $region29
  $region28: #{position_wise_feed_forward.1} parent=0 // pred_region
    _
  $region29: #{position_wise_feed_forward.1} parent=0 // pred_fallthru
    _

</llo_original>
